<compile_context>
chip_gen: v7x
topology: tpu7x:2x2x1
jax: 0.10.0
libtpu: 0.0.40
codegen_flags: <defaults>
</compile_context>

<pallas_src>
import jax
import jax.numpy as jnp
from jax.experimental import pallas as pl
from jax.experimental.pallas import tpu as pltpu

BOND_TYPE_CH = 16
BOND_RING_CH = 16
EMB_DIM = BOND_TYPE_CH + BOND_RING_CH   # 32
NUM_EMBED = 10
SUB = 512          # in-kernel sub-chunk rows (bounds temporaries / vreg pressure)
TILE_MAX = 4096    # rows per grid step (DMA granularity); VMEM-safe on v5e/v6e/v7x
LANE = 128


def _round_up(x, m):
    return ((x + m - 1) // m) * m


def _embed_bond_chem_kernel(edge_ref, tbl_ref, out_ref):
    # edge_ref: (TILE, F) f32 ; tbl_ref: (20, 32) f32 block-diag ; out_ref: (TILE, 32+F-2) f32
    tile, f = edge_ref.shape
    tbl = tbl_ref[...]                      # hoist: read the tiny fused table once per tile

    def process(r0, sz):
        # Fused type/ring lookup: one one-hot over 2*NUM_EMBED classes, one small MXU matmul.
        idx0 = edge_ref[pl.ds(r0, sz), 0:1].astype(jnp.int32)                # (sz, 1)
        idx1 = edge_ref[pl.ds(r0, sz), 1:2].astype(jnp.int32) + NUM_EMBED    # (sz, 1)
        iota = jax.lax.broadcasted_iota(jnp.int32, (sz, 2 * NUM_EMBED), 1)
        onehot = ((iota == idx0) | (iota == idx1)).astype(jnp.float32)
        emb = jnp.dot(onehot, tbl, preferred_element_type=jnp.float32)       # (sz, 32)
        # Two sub-range stores; no tile-wide concat / full-tile materialization.
        out_ref[pl.ds(r0, sz), 0:EMB_DIM] = emb
        if f > 2:
            out_ref[pl.ds(r0, sz), EMB_DIM:] = edge_ref[pl.ds(r0, sz), 2:]

    # Decouple DMA granularity (big tile) from the vector working set (SUB-row chunks).
    n_full, tail = divmod(tile, SUB)
    if n_full > 0:
        def body(c, carry):
            process(pl.multiple_of(c * SUB, SUB), SUB)
            return carry
        jax.lax.fori_loop(0, n_full, body, 0, unroll=True)
    if tail:
        process(n_full * SUB, tail)         # static start, multiple of 8 rows


def embed_bond_chem(edge_attr, type_table, ring_table, *, tile_max=TILE_MAX):
    E, F = edge_attr.shape
    out_dim = EMB_DIM + (F - 2)

    # Step count first (>= 2, and even so "parallel" splits evenly across v7x's two
    # TensorCores), then the tile, so E_pad waste stays below ~one tile.
    n_steps = max(2, pl.cdiv(E, tile_max))
    if n_steps % 2:
        n_steps += 1
    tile = min(tile_max, max(8, _round_up(pl.cdiv(E, n_steps), 8)))
    E_pad = n_steps * tile
    if E_pad != E:
        # Zero-padding is safe: index 0 is a valid table row; padded rows are sliced off below.
        edge_attr = jnp.pad(edge_attr, ((0, E_pad - E), (0, 0)))

    # Block-diagonal fused table: [[type_tbl, 0], [0, ring_tbl]]  -> (20, 32).
    fused_table = jnp.zeros((2 * NUM_EMBED, EMB_DIM), jnp.float32)
    fused_table = fused_table.at[:NUM_EMBED, :BOND_TYPE_CH].set(type_table)
    fused_table = fused_table.at[NUM_EMBED:, BOND_TYPE_CH:].set(ring_table)

    # VMEM budget: the last dim of every block lane-pads to 128, so each (tile, F) / (tile,
    # out_dim) block occupies tile*128*4 B; double-buffered in+out plus the tiny table plus
    # ~SUB-row temporaries.  Set the scoped limit explicitly so big tiles compile everywhere.
    in_blk = tile * _round_up(F, LANE) * 4
    out_blk = tile * _round_up(out_dim, LANE) * 4
    tbl_blk = _round_up(2 * NUM_EMBED, 8) * _round_up(EMB_DIM, LANE) * 4
    vmem_limit = int(min(2 * (in_blk + out_blk + tbl_blk) + (8 << 20), 64 << 20))

    cost = pl.CostEstimate(
        flops=2 * E_pad * (2 * NUM_EMBED) * EMB_DIM,
        transcendentals=0,
        bytes_accessed=4 * (E_pad * (F + out_dim) + fused_table.size),
    )

    out = pl.pallas_call(
        _embed_bond_chem_kernel,
        out_shape=jax.ShapeDtypeStruct((E_pad, out_dim), jnp.float32),
        grid_spec=pltpu.PrefetchScalarGridSpec(
            num_scalar_prefetch=0,
            grid=(n_steps,),
            in_specs=[
                pl.BlockSpec((tile, F), lambda i: (i, 0)),
                pl.BlockSpec((2 * NUM_EMBED, EMB_DIM), lambda i: (0, 0)),
            ],
            out_specs=pl.BlockSpec((tile, out_dim), lambda i: (i, 0)),
        ),
        compiler_params=pltpu.CompilerParams(
            dimension_semantics=("parallel",),
            vmem_limit_bytes=vmem_limit,
        ),
        cost_estimate=cost,
    )(edge_attr, fused_table)

    return out[:E] if E_pad != E else out


def _reference(edge_attr, type_table, ring_table):
    return jnp.concatenate(
        [type_table[edge_attr[:, 0].astype(jnp.int32)],
         ring_table[edge_attr[:, 1].astype(jnp.int32)],
         edge_attr[:, 2:]], axis=1)


if __name__ == "__main__":
    key = jax.random.PRNGKey(0)
    k_t, k_r, k_e = jax.random.split(key, 3)

    F = 8
    # Deterministic synthetic embedding tables (nn.Embedding(10, 16) weights).
    type_table = jax.random.normal(k_t, (NUM_EMBED, BOND_TYPE_CH), dtype=jnp.float32)
    ring_table = jax.random.normal(k_r, (NUM_EMBED, BOND_RING_CH), dtype=jnp.float32)

    ok = True
    # E=19: ragged, tail-only sub-chunk path.  E=3000: exercises the unrolled fori_loop
    # over full 512-row sub-chunks plus a ragged tail chunk.
    for E in (19, 3000):
        k_e, k_i0, k_i1, k_f = jax.random.split(k_e, 4)
        idx0 = jax.random.randint(k_i0, (E, 1), 0, NUM_EMBED).astype(jnp.float32)
        idx1 = jax.random.randint(k_i1, (E, 1), 0, NUM_EMBED).astype(jnp.float32)
        feats = jax.random.normal(k_f, (E, F - 2), dtype=jnp.float32)
        edge_attr = jnp.concatenate([idx0, idx1, feats], axis=1)

        out = embed_bond_chem(edge_attr, type_table, ring_table)
        out = jax.block_until_ready(out)

        ref = _reference(edge_attr, type_table, ring_table)
        ok &= out.shape == (E, EMB_DIM + F - 2)
        ok &= bool(jnp.allclose(out, ref, atol=1e-5))

    assert ok, "mismatch vs reference"
    print("KERNEL_OK")
</pallas_src>

<mosaic_0001>
module attributes {stable_mosaic.version = 11 : i64} {
  func.func @_embed_bond_chem_kernel(%arg0: i32, %arg1: memref<16x8xf32, #tpu.memory_space<vmem>>, %arg2: memref<20x32xf32, #tpu.memory_space<vmem>>, %arg3: memref<16x38xf32, #tpu.memory_space<vmem>>) attributes {dimension_semantics = [#tpu.dimension_semantics<parallel>], iteration_bounds = array<i64: 2>, scalar_prefetch = 0 : i64, scratch_operands = 0 : i64, tpu.core_type = #tpu.core_type<tc>, window_params = [{transform_indices = @transform_0, window_bounds = array<i64: 16, 8>}, {pipeline_mode = #tpu.pipeline_mode<synchronous>, transform_indices = @transform_1, window_bounds = array<i64: 20, 32>}, {transform_indices = @transform_2, window_bounds = array<i64: 16, 38>}]} {
    %c0 = arith.constant 0 : index
    %c0_0 = arith.constant 0 : index
    %0 = vector.load %arg2[%c0, %c0_0] : memref<20x32xf32, #tpu.memory_space<vmem>>, vector<20x32xf32>
    %c0_1 = arith.constant 0 : index
    %c0_2 = arith.constant 0 : index
    %1 = vector.load %arg1[%c0_1, %c0_2] : memref<16x8xf32, #tpu.memory_space<vmem>>, vector<16x1xf32>
    %2 = arith.fptosi %1 : vector<16x1xf32> to vector<16x1xi32>
    %c0_3 = arith.constant 0 : index
    %c1 = arith.constant 1 : index
    %3 = vector.load %arg1[%c0_3, %c1] : memref<16x8xf32, #tpu.memory_space<vmem>>, vector<16x1xf32>
    %4 = arith.fptosi %3 : vector<16x1xf32> to vector<16x1xi32>
    %c10_i32 = arith.constant 10 : i32
    %5 = vector.broadcast %c10_i32 : i32 to vector<16x1xi32>
    %6 = arith.addi %4, %5 : vector<16x1xi32>
    %7 = tpu.iota {dimensions = array<i32: 1>} : vector<16x20xi32>
    %8 = vector.broadcast %2 : vector<16x1xi32> to vector<16x20xi32>
    %9 = arith.cmpi eq, %7, %8 : vector<16x20xi32>
    %10 = vector.broadcast %6 : vector<16x1xi32> to vector<16x20xi32>
    %11 = arith.cmpi eq, %7, %10 : vector<16x20xi32>
    %12 = arith.ori %9, %11 : vector<16x20xi1>
    %13 = arith.extui %12 : vector<16x20xi1> to vector<16x20xi32>
    %14 = arith.sitofp %13 : vector<16x20xi32> to vector<16x20xf32>
    %cst = arith.constant dense<0.000000e+00> : vector<16x32xf32>
    %15 = tpu.matmul %14, %0, %cst {dimension_numbers = #tpu.dot_dimension_numbers<[1], [0], [0], [1], [0, 0, 1, 1], [], []>} : vector<16x20xf32>, vector<20x32xf32>, vector<16x32xf32> -> vector<16x32xf32>
    %c0_4 = arith.constant 0 : index
    %c0_5 = arith.constant 0 : index
    %16 = vector.load %arg3[%c0_4, %c0_5] : memref<16x38xf32, #tpu.memory_space<vmem>>, vector<16x32xf32>
    tpu.vector_store %arg3[%c0_4, %c0_5], %15 {strides = array<i32>} : memref<16x38xf32, #tpu.memory_space<vmem>>, vector<16x32xf32>,
    %c0_6 = arith.constant 0 : index
    %c2 = arith.constant 2 : index
    %17 = vector.load %arg1[%c0_6, %c2] : memref<16x8xf32, #tpu.memory_space<vmem>>, vector<16x6xf32>
    %c0_7 = arith.constant 0 : index
    %c32 = arith.constant 32 : index
    %18 = vector.load %arg3[%c0_7, %c32] : memref<16x38xf32, #tpu.memory_space<vmem>>, vector<16x6xf32>
    tpu.vector_store %arg3[%c0_7, %c32], %17 {strides = array<i32>} : memref<16x38xf32, #tpu.memory_space<vmem>>, vector<16x6xf32>,
    return
  }
  func.func @transform_0(%arg0: i32) -> (i32, i32) {
    %c0_i32 = arith.constant 0 : i32
    %c0_i32_0 = arith.constant 0 : i32
    return %arg0, %c0_i32 : i32, i32
  }
  func.func @transform_1(%arg0: i32) -> (i32, i32) {
    %c0_i32 = arith.constant 0 : i32
    %c0_i32_0 = arith.constant 0 : i32
    %c0_i32_1 = arith.constant 0 : i32
    return %c0_i32, %c0_i32_0 : i32, i32
  }
  func.func @transform_2(%arg0: i32) -> (i32, i32) {
    %c0_i32 = arith.constant 0 : i32
    %c0_i32_0 = arith.constant 0 : i32
    return %arg0, %c0_i32 : i32, i32
  }
}

</mosaic_0001>

<llo_original>
// kernel: tpu_custom_call.1
$region0: #{tpu_custom_call.1}
  #allocation0 [shape = 'u32[]', space=smem, size = 0x4, offset = 0x4, fixed_abs, tag = 'smem constant byte address 0x4 - core index']
  #allocation1 [shape = 'u32[144,128]{1,0:T(1,128)}', space=vmem, size = 0x12000, scoped, tag = 'internal scratch']
  %s0 = inlined_call_operand.vmem [shape: f32[32,8], index: 0, kind: input, shape index: {}]
  %s1 = inlined_call_operand.vmem [shape: f32[20,32], index: 1, kind: input, shape index: {}]
  %s2 = inlined_call_operand.hbm [shape: f32[32,38], index: 2, kind: output, shape index: {}]
  %s3 = sld [smem:[#allocation0]]
  $region41: #{tpu_custom_call.1} parent=0
    _
  %s5 = ssub.s32 1, %s3
  %s6 = scalar_select 0, %s5, %s3
  $region1: #{tpu_custom_call.1} parent=0
    #allocation2 [shape = 'u8[16384]{0}', space=vmem, size = 0x4000, scoped, tag = 'output window, operand 0']
    #allocation3 [shape = 's32[2]{0}', space=sflag, size = 0x8, scoped, tag = 'scoped memory for tpu_custom_call.1']
    %7 = vsyncpa [#allocation3], 0
    %s8 = scalar_lea.sflag [#allocation3], 1
    %9 = vsyncpa %s8, 0
    loop: start=0, step=1, limit=4
    $region2: #{tpu_custom_call.1} parent=1 // loop_pre_header
      _
    $region3: #{tpu_custom_call.1} parent=1 // loop_header
      %s11 = sphi 0, %s15
      %p12 = scmp.ge.s32.totalorder %s11, 4
      %s21 = sphi 0, %s23
      %s24 = sphi 0, %s21
      %s25 = sphi 0, %s24
      %s41 = sphi 0, %s25
      %s45 = sphi 0, %s45
      %s47 = sphi 0, %s45
      %s48 = sphi 0, %s47
      %s62 = sphi 0, %s48
      %s68 = sphi 0, %s70
      %s71 = sphi 0, %s68
      %s72 = sphi 0, %s71
      %s88 = sphi 0, %s72
    $region4: #{tpu_custom_call.1} parent=1 // loop_header_branch
      %14 = sbr.rel (%p12) target = $region8
    $region5: #{tpu_custom_call.1} parent=1 // loop_body
      %s16 = ssub.s32 %s11, 1
      %s17 = ssub.s32 %s11, 2
      %s18 = sadd.s32 %s11, 1
      %s19 = ssub.s32 %s11, %s18
      %p20 = scmp.eq.s32.totalorder %s19, 0
      %s22 = sadd.s32 %s21, 1
      %s23 = scalar_select %p20, %s21, %s22
      %p26 = pneg %p20
      %p27 = scmp.eq.s32.totalorder %s11, 1
      %p28 = por %p26, %p27
      %p29 = scmp.ne.s32.totalorder %s21, %s24
      %p30 = scmp.eq.s32.totalorder %s11, 0
      %p31 = por %p29, %p30
      %p32 = scmp.ne.s32.totalorder %s21, %s24
      %p33 = scmp.eq.s32.totalorder %s16, 1
      %p34 = por %p32, %p33
      %p35 = scmp.ne.s32.totalorder %s24, %s25
      %p36 = scmp.eq.s32.totalorder %s16, 0
      %p37 = por %p35, %p36
      %p38 = scmp.ne.s32.totalorder %s24, %s25
      %p39 = scmp.eq.s32.totalorder %s17, 1
      %p40 = por %p38, %p39
      %p42 = scmp.ne.s32.totalorder %s25, %s41
      %p43 = scmp.eq.s32.totalorder %s17, 0
      %p44 = por %p42, %p43
      %s46 = sadd.s32 %s45, 1
      %p49 = scmp.eq.s32.totalorder %s11, 1
      %p50 = scmp.ne.s32.totalorder %s45, %s47
      %p51 = scmp.eq.s32.totalorder %s11, 0
      %p52 = por %p50, %p51
      %p53 = scmp.ne.s32.totalorder %s45, %s47
      %p54 = scmp.eq.s32.totalorder %s16, 1
      %p55 = por %p53, %p54
      %p56 = scmp.ne.s32.totalorder %s47, %s48
      %p57 = scmp.eq.s32.totalorder %s16, 0
      %p58 = por %p56, %p57
      %p59 = scmp.ne.s32.totalorder %s47, %s48
      %p60 = scmp.eq.s32.totalorder %s17, 1
      %p61 = por %p59, %p60
      %p63 = scmp.ne.s32.totalorder %s48, %s62
      %p64 = scmp.eq.s32.totalorder %s17, 0
      %p65 = por %p63, %p64
      %s66 = ssub.s32 %s11, %s18
      %p67 = scmp.eq.s32.totalorder %s66, 0
      %s69 = sadd.s32 %s68, 1
      %s70 = scalar_select %p67, %s68, %s69
      %p73 = pneg %p67
      %p74 = scmp.eq.s32.totalorder %s11, 1
      %p75 = por %p73, %p74
      %p76 = scmp.ne.s32.totalorder %s68, %s71
      %p77 = scmp.eq.s32.totalorder %s11, 0
      %p78 = por %p76, %p77
      %p79 = scmp.ne.s32.totalorder %s68, %s71
      %p80 = scmp.eq.s32.totalorder %s16, 1
      %p81 = por %p79, %p80
      %p82 = scmp.ne.s32.totalorder %s71, %s72
      %p83 = scmp.eq.s32.totalorder %s16, 0
      %p84 = por %p82, %p83
      %p85 = scmp.ne.s32.totalorder %s71, %s72
      %p86 = scmp.eq.s32.totalorder %s17, 1
      %p87 = por %p85, %p86
      %p89 = scmp.ne.s32.totalorder %s72, %s88
      %p90 = scmp.eq.s32.totalorder %s17, 0
      %p91 = por %p89, %p90
      %p92 = scmp.le.s32.totalorder 1, %s11
      %p93 = scmp.lt.s32.totalorder %s11, 3
      %p94 = pnand %p92, %p93
      %p95 = pneg %p94
      // Predicated region
      $region9: #{tpu_custom_call.1} parent=5 // pred_check
        _
      $region10: #{tpu_custom_call.1} parent=5 // pred_check_branch
        %97 = sbr.rel (%p94) target = $region12
      $region11: #{tpu_custom_call.1} parent=5 // pred_region
        %s98 = ssub.s32 %s11, 1
        // Predicated region
        $region13: #{tpu_custom_call.1} parent=11 // pred_check
          %p99 = pneg %p58
        $region14: #{tpu_custom_call.1} parent=11 // pred_check_branch
          %101 = sbr.rel (%p99) target = $region16
        $region15: #{tpu_custom_call.1} parent=11 // pred_region
          _
        $region16: #{tpu_custom_call.1} parent=11 // pred_fallthru
          _
      $region12: #{tpu_custom_call.1} parent=5 // pred_fallthru
        _
      %p102 = scmp.lt.s32.totalorder %s11, 2
      // Predicated region
      $region17: #{tpu_custom_call.1} parent=5 // pred_check
        %p103 = pneg %p102
      $region18: #{tpu_custom_call.1} parent=5 // pred_check_branch
        %105 = sbr.rel (%p103) target = $region20
      $region19: #{tpu_custom_call.1} parent=5 // pred_region
        // Predicated region
        $region21: #{tpu_custom_call.1} parent=19 // pred_check
          %p106 = pneg %p31
        $region22: #{tpu_custom_call.1} parent=19 // pred_check_branch
          %108 = sbr.rel (%p106) target = $region24
        $region23: #{tpu_custom_call.1} parent=19 // pred_region
          %s109 = smul.u32 2, %s11
          %p110 = scmp.lt.s32.totalorder %s109, 3
          %s111 = scalar_select %p110, %s109, 3
          %s112 = smul.addr %s111, 8
          %s113 = scalar_lea.vmem %s0, %s112
          %s114 = smul.u32 2, %s11
        $region24: #{tpu_custom_call.1} parent=19 // pred_fallthru
          _
      $region20: #{tpu_custom_call.1} parent=5 // pred_fallthru
        _
      %p115 = scmp.le.s32.totalorder 1, %s11
      %p116 = scmp.lt.s32.totalorder %s11, 3
      %p117 = pnand %p115, %p116
      %p118 = pneg %p117
      // Predicated region
      $region25: #{tpu_custom_call.1} parent=5 // pred_check
        _
      $region26: #{tpu_custom_call.1} parent=5 // pred_check_branch
        %120 = sbr.rel (%p117) target = $region28
      $region27: #{tpu_custom_call.1} parent=5 // pred_region
        %s121 = ssub.s32 %s11, 1
        %s122 = smul.u32 2, %s16
        %p123 = scmp.lt.s32.totalorder %s122, 3
        %s124 = scalar_select %p123, %s122, 3
        %s125 = smul.addr %s124, 8
        %s126 = scalar_lea.vmem %s0, %s125
        %p127 = pneg %p37
        %p128 = pneg %p34
        %p129 = pneg %p58
        %p130 = pneg %p55
        %p131 = pneg %p84
        %p132 = pneg %p81
        %s133 = sand.u32 %s71, 1
        %s134 = scalar_lea.sflag [#allocation3], %s133
        %s135 = sand.u32 %s71, 1
        %s136 = smul.addr %s135, 16
        %s137 = scalar_lea.vmem [#allocation2], %s136
        %s138 = smul.u32 2, %s16
        %p139 = scmp.lt.s32.totalorder %s138, 3
        %s140 = scalar_select %p139, %s138, 3
        %s141 = smul.addr %s140, 8
        %s142 = scalar_lea.vmem %s0, %s141
        %s143 = smul.u32 2, %s16
        %s144 = smul.u32 2, %s16
        %v145 = vld [vmem:[%s1] sm:$0xff]
        %v146 = vld [vmem:[%s1 + $0x8] sm:$0xff]
        %v147 = vld [vmem:[%s1 + $0x10] sm:$0xf]
        %v148 = vld [vmem:[%s142] sm:$0xff]
        %v149 = vld [vmem:[%s142 + $0x8] sm:$0xff]
        %v150 = vcvt.f32.s32.to.zero.pseudo %v148
        %v151 = vcvt.f32.s32.to.zero.pseudo %v149
        %v152 = vadd.s32 %v150, 10
        %v153 = vadd.s32 %v151, 10
        %v154 = vlaneseq
        %v155 = vand.u32 %v154, 127
        %156 = vset.pattern.permute.xlu0 0
        %157 = vperm.xlu0 %156, %v150
        %v158 = vpop.permute.xlu0 %157
        %159 = vset.pattern.permute.xlu0 0
        %160 = vperm.xlu0 %159, %v151
        %v161 = vpop.permute.xlu0 %160
        %vm162 = vcmp.eq.s32.totalorder %v155, %v158
        %vm163 = vcmp.eq.s32.totalorder %v155, %v161
        %164 = vset.pattern.permute.xlu0 1
        %165 = vperm.xlu0 %164, %v152
        %v166 = vpop.permute.xlu0 %165
        %167 = vset.pattern.permute.xlu0 1
        %168 = vperm.xlu0 %167, %v153
        %v169 = vpop.permute.xlu0 %168
        %vm170 = vcmp.eq.s32.totalorder %v155, %v166
        %vm171 = vcmp.eq.s32.totalorder %v155, %v169
        %vm172 = vmor %vm162, %vm170
        %vm173 = vmor %vm163, %vm171
        %v174 = vsel %vm172, 1, 0
        %v175 = vsel %vm173, 1, 0
        %v176 = vcvt.s32.f32 %v174
        %v177 = vcvt.s32.f32 %v175
        %vm178 = vcmask 162816
        %v180 = vsel %vm178, %v176, 0
        %v183 = vsel %vm178, %v177, 0
        %vm185 = vcmask 1043456
        %v187 = vsel %vm185, %v147, 0
        %189 = vmatprep.subr.mxu0 0.0
        %190 = vmatpush1.msra.mxu0 %v145
        %191 = vmatprep.subr.mxu0 0.0
        %192 = vmatpush1.msra.mxu0 %v146
        %193 = vmatprep.subr.mxu0 0.0
        %194 = vmatpush1.msra.mxu0 %v187
        %195 = vmatprep.subr.mxu0 0.0
        %196 = vmatpush1.msra.mxu0 0.0
        %197 = vmatprep.subr.mxu0 0.0
        %198 = vmatpush1.msra.mxu0 0.0
        %199 = vmatprep.subr.mxu0 0.0
        %200 = vmatpush1.msra.mxu0 0.0
        %201 = vmatprep.subr.mxu0 0.0
        %202 = vmatpush1.msra.mxu0 0.0
        %203 = vmatprep.subr.mxu0 0.0
        %204 = vmatpush1.msra.mxu0 0.0
        %205 = vmatprep.subr.mxu0 0.0
        %206 = vmatpush1.msra.mxu0 0.0
        %207 = vmatprep.subr.mxu0 0.0
        %208 = vmatpush1.msra.mxu0 0.0
        %209 = vmatprep.subr.mxu0 0.0
        %210 = vmatpush1.msra.mxu0 0.0
        %211 = vmatprep.subr.mxu0 0.0
        %212 = vmatpush1.msra.mxu0 0.0
        %213 = vmatprep.subr.mxu0 0.0
        %214 = vmatpush1.msra.mxu0 0.0
        %215 = vmatprep.subr.mxu0 0.0
        %216 = vmatpush1.msra.mxu0 0.0
        %217 = vmatprep.subr.mxu0 0.0
        %218 = vmatpush1.msra.mxu0 0.0
        %219 = vmatprep.subr.mxu0 0.0
        %220 = vmatpush1.msra.mxu0 0.0
        %221 = vmatprep.subr.mxu0 0.0
        %222 = vmatpush1.msra.mxu0 0.0
        %223 = vmatprep.subr.mxu0 0.0
        %224 = vmatpush1.msra.mxu0 0.0
        %225 = vmatprep.subr.mxu0 0.0
        %226 = vmatpush1.msra.mxu0 0.0
        %227 = vmatprep.subr.mxu0 0.0
        %228 = vmatpush1.msra.mxu0 0.0
        %229 = vmatprep.subr.mxu0 0.0
        %230 = vmatpush1.msra.mxu0 0.0
        %231 = vmatprep.subr.mxu0 0.0
        %232 = vmatpush1.msra.mxu0 0.0
        %233 = vmatprep.subr.mxu0 0.0
        %234 = vmatpush1.msra.mxu0 0.0
        %235 = vmatprep.subr.mxu0 0.0
        %236 = vmatpush1.msra.mxu0 0.0
        %237 = vmatprep.subr.mxu0 0.0
        %238 = vmatpush1.msra.mxu0 0.0
        %239 = vmatprep.subr.mxu0 0.0
        %240 = vmatpush1.msra.mxu0 0.0
        %241 = vmatprep.subr.mxu0 0.0
        %242 = vmatpush1.msra.mxu0 0.0
        %243 = vmatprep.subr.mxu0 0.0
        %244 = vmatpush1.msra.mxu0 0.0
        %245 = vmatprep.subr.mxu0 0.0
        %246 = vmatpush1.msra.mxu0 0.0
        %247 = vmatprep.subr.mxu0 0.0
        %248 = vmatpush1.msra.mxu0 0.0
        %249 = vmatprep.subr.mxu0 0.0
        %250 = vmatpush1.msra.mxu0 0.0
        %251 = vmatprep.subr.mxu0 0.0
        %252 = vmatpush1.msra.mxu0 0.0
        %253 = vmatprep.mubr.f32.mxu0 0.0
        %254 = vmatmul.mubr.f32.gmra.mrb[0].mxu0 %v180
        %v255 = vpop.f32.mrb[0].mxu0
        %v256 = vadd.f32 0.0, %v255
        %v257 = vpop.f32.mrb[0].mxu0
        %258 = vmatprep.mubr.f32.mxu0 0.0
        %259 = vmatmul.mubr.f32.gmra.mrb[0].mxu0 %v183
        %v260 = vpop.f32.mrb[0].mxu0
        %v261 = vadd.f32 0.0, %v260
        %v262 = vpop.f32.mrb[0].mxu0
        %263 = vdwg.mxu0
        %vm264 = vcmask 261120
        %265 = vst.msk [vmem:[%s137] sm:$0xff] %vm264, %v256
        %266 = vst.msk [vmem:[%s137 + $0x8] sm:$0xff] %vm264, %v261
        %v267 = vld [vmem:[%s142] sm:$0xff]
        %v268 = vld [vmem:[%s142 + $0x8] sm:$0xff]
        %271 = vrot.lane.b32.xlu0 %v267, 30
        %v272 = vpop.permute.xlu0 %271
        %273 = vrot.lane.b32.xlu0 %v268, 30
        %v274 = vpop.permute.xlu0 %273
        %vm277 = vcmask 310528
        %278 = vst.msk [vmem:[%s137] sm:$0xff] %vm277, %v272
        %279 = vst.msk [vmem:[%s137 + $0x8] sm:$0xff] %vm277, %v274
        %s280 = sand.u32 %s71, 1
        %s281 = scalar_lea.sflag [#allocation3], %s280
        %s282 = sand.u32 %s71, 1
        %s283 = smul.addr %s282, 16
        %s284 = scalar_lea.vmem [#allocation2], %s283
        // Predicated region
        $region29: #{tpu_custom_call.1} parent=27 // pred_check
          %p285 = pneg %p81
        $region30: #{tpu_custom_call.1} parent=27 // pred_check_branch
          %287 = sbr.rel (%p285) target = $region32
        $region31: #{tpu_custom_call.1} parent=27 // pred_region
          %s288 = smul.u32 2, %s16
          %s290 = ssub.s32 256, 256
          %291 = vsyncadd %s281, %s290
          %s292 = smul.addr %s288, 128
          %s293 = scalar_lea.hbm %s2, %s292
          %s294 = sshll.u32 %s284, 4
          %s295 = int_to_ptr.vmem [resolvable:$true] %s294
          %300 = dma.vmem_to_hbm [thread:$0]  %s295, 256, %s293, %s281, 128, 128, 8
        $region32: #{tpu_custom_call.1} parent=27 // pred_fallthru
          _
      $region28: #{tpu_custom_call.1} parent=5 // pred_fallthru
        _
      %p301 = scmp.le.s32.totalorder 2, %s11
      // Predicated region
      $region33: #{tpu_custom_call.1} parent=5 // pred_check
        %p302 = pneg %p301
      $region34: #{tpu_custom_call.1} parent=5 // pred_check_branch
        %304 = sbr.rel (%p302) target = $region36
      $region35: #{tpu_custom_call.1} parent=5 // pred_region
        %s305 = ssub.s32 %s11, 2
        // Predicated region
        $region37: #{tpu_custom_call.1} parent=35 // pred_check
          %p306 = pneg %p87
        $region38: #{tpu_custom_call.1} parent=35 // pred_check_branch
          %308 = sbr.rel (%p306) target = $region40
        $region39: #{tpu_custom_call.1} parent=35 // pred_region
          %s309 = sand.u32 %s72, 1
          %s310 = scalar_lea.sflag [#allocation3], %s309
          %s311 = sand.u32 %s72, 1
          %s312 = smul.addr %s311, 16
          %s313 = scalar_lea.vmem [#allocation2], %s312
          %314 = dma.done %s310, 256
        $region40: #{tpu_custom_call.1} parent=35 // pred_fallthru
          _
      $region36: #{tpu_custom_call.1} parent=5 // pred_fallthru
        _
    $region6: #{tpu_custom_call.1} parent=1 // loop_footer
      %s15 = sadd.s32 1, %s11
    $region7: #{tpu_custom_call.1} parent=1 // loop_footer_branch
      %10 = sbr.rel target = $region3
    $region8: #{tpu_custom_call.1} parent=1 // loop_exit
      _
    %315 = vsyncpa [#allocation3], 1
    %s316 = scalar_lea.sflag [#allocation3], 1
    %317 = vsyncpa %s316, 1

</llo_original>
